<compile_context>
chip_gen: v7x
topology: tpu7x:2x2x1
jax: 0.10.0
libtpu: 0.0.40
codegen_flags: <defaults>
</compile_context>

<pallas_src>
import functools

import jax
import jax.numpy as jnp
from jax.experimental import pallas as pl
from jax.experimental.pallas import tpu as pltpu

SMOOTH = 1e-06
_LANE = 128
_ROW_QUANTUM = 32            # covers int8 (32,128) and bf16 (16,128) native tiles
_TILE_BYTE_TARGET = 2 << 20  # ~2 MiB of logits per grid step (VMEM-safe on v7x)


def _dice_kernel(labels_ref, pred_ref, num_ref, den_ref, *, has_pad):
    """One (split, batch, spatial-tile) grid step.

    labels_ref: (1, 1, R, 128) int8/int32 class ids (-1 marks padded voxels)
    pred_ref:   (1, C, R, 128) logits
    num_ref:    (1, 1, C, 8, 128) f32 partial sums of (onehot - p)^2 (resident accumulator)
    den_ref:    (1, 1, C, 8, 128) f32 partial sums of onehot + p^2   (resident accumulator)
    """
    s = pl.program_id(2)
    C = pred_ref.shape[1]
    R = pred_ref.shape[2]

    @pl.when(s == 0)
    def _init():
        num_ref[...] = jnp.zeros_like(num_ref)
        den_ref[...] = jnp.zeros_like(den_ref)

    labels = labels_ref[0, 0].astype(jnp.int32)               # (R, 128)

    # v6e/v7x VALUs run bf16 at 2x: keep the channel max / shift in bf16 when
    # the input is bf16 and only go to f32 at the exp (f32 inputs stay f32).
    cdt = jnp.bfloat16 if pred_ref.dtype == jnp.bfloat16 else jnp.float32
    slabs = [pred_ref[0, c].astype(cdt) for c in range(C)]    # C x (R, 128)

    # Numerically-stable softmax over the (small, static) class axis, expressed
    # as elementwise ops across dense per-class slabs.
    m = slabs[0]
    for c in range(1, C):
        m = jnp.maximum(m, slabs[c])
    es = [jnp.exp((slabs[c] - m).astype(jnp.float32)) for c in range(C)]
    z = es[0]
    for c in range(1, C):
        z = z + es[c]
    inv_z = pl.reciprocal(z, approx=True)                     # EUP slot, ~free
    if has_pad:
        # Padded voxels (label < 0): zero the softmax so they add 0 everywhere.
        inv_z = jnp.where(labels >= 0, inv_z, 0.0)

    # Class-unrolled (C is tiny & static): no (C, R, 128) one-hot temporary,
    # no cross-sublane label broadcast.
    for c in range(C):
        p = es[c] * inv_z                                      # (R, 128) f32
        onehot = (labels == c).astype(jnp.float32)             # (R, 128)
        diff = onehot - p
        num_slab = diff * diff                                 # (onehot - p)^2
        den_slab = onehot + p * p                              # onehot^2 == onehot
        # Deferred reduction: fold only across whole vregs (pure VPU adds) into
        # a lane-dense (8, 128) accumulator per class; the XLU reduce happens
        # once, in the JAX glue, on a tiny array.
        num_ref[0, 0, c] += jnp.sum(num_slab.reshape(R // 8, 8, _LANE), axis=0)
        den_ref[0, 0, c] += jnp.sum(den_slab.reshape(R // 8, 8, _LANE), axis=0)
    # TODO(synk): optional v7x-only variant could offload these reduce-adds to
    # the idle MXU (ones-vector matmul) if a bundle dump shows VALU still binds.


def _choose_tile_rows(total_rows, n_classes, pred_bytes):
    """Rows (of 128 lanes) per grid step: multiple of _ROW_QUANTUM, sized so the
    logits tile is ~_TILE_BYTE_TARGET bytes, never more than the (rounded) data."""
    budget_rows = max(_TILE_BYTE_TARGET // (n_classes * _LANE * pred_bytes), _ROW_QUANTUM)
    rows = max((budget_rows // _ROW_QUANTUM) * _ROW_QUANTUM, _ROW_QUANTUM)
    needed = ((total_rows + _ROW_QUANTUM - 1) // _ROW_QUANTUM) * _ROW_QUANTUM
    return min(rows, needed)


def dice_loss(y_true, y_pred, *, tile_rows=None, n_splits=None):
    """Dice loss matching mist-torch DiceLoss.forward.

    y_true: (B, 1, D, H, W) integer class ids in [0, C); y_pred: (B, C, D, H, W) logits.
    """
    B, C = y_pred.shape[0], y_pred.shape[1]
    S = y_pred.shape[2] * y_pred.shape[3] * y_pred.shape[4]

    pred_bytes = jnp.dtype(y_pred.dtype).itemsize
    # Labels travel as int8 when class ids fit (cuts label HBM traffic 4x).
    label_dtype = jnp.int8 if C <= 127 else jnp.int32

    total_rows = pl.cdiv(S, _LANE)
    rows = tile_rows if tile_rows is not None else _choose_tile_rows(total_rows, C, pred_bytes)
    if rows % _ROW_QUANTUM:
        raise ValueError(f"tile_rows must be a multiple of {_ROW_QUANTUM}")
    rows_pad = pl.cdiv(total_rows, rows) * rows
    s_pad = rows_pad * _LANE
    n_tiles = rows_pad // rows
    pad = s_pad - S

    pred_flat = y_pred.reshape(B, C, S)
    labels_flat = y_true.reshape(B, 1, S).astype(label_dtype)
    if pad:
        # Padding: label -1 (matches no class) + zero logits; masked in-kernel.
        pred_flat = jnp.pad(pred_flat, ((0, 0), (0, 0), (0, pad)))
        labels_flat = jnp.pad(labels_flat, ((0, 0), (0, 0), (0, pad)), constant_values=-1)

    pred4 = pred_flat.reshape(B, C, rows_pad, _LANE)
    labels4 = labels_flat.reshape(B, 1, rows_pad, _LANE)

    if n_splits is None:
        # Keep the parallel-axis product even (v7x has 2 TensorCores) even when B is odd.
        n_splits = 2 if (B % 2 == 1 and n_tiles % 2 == 0 and n_tiles >= 2) else 1
    if n_tiles % n_splits:
        raise ValueError("n_splits must evenly divide the number of spatial tiles")
    tps = n_tiles // n_splits

    def _in_map(n, b, s):
        return (b, 0, n * tps + s, 0)

    def _out_map(n, b, s):
        return (n, b, 0, 0, 0)

    kernel = functools.partial(_dice_kernel, has_pad=bool(pad))

    num_p, den_p = pl.pallas_call(
        kernel,
        out_shape=(
            jax.ShapeDtypeStruct((n_splits, B, C, 8, _LANE), jnp.float32),
            jax.ShapeDtypeStruct((n_splits, B, C, 8, _LANE), jnp.float32),
        ),
        grid_spec=pltpu.PrefetchScalarGridSpec(
            num_scalar_prefetch=0,
            grid=(n_splits, B, tps),
            in_specs=[
                pl.BlockSpec((1, 1, rows, _LANE), _in_map),   # labels (int8)
                pl.BlockSpec((1, C, rows, _LANE), _in_map),   # logits
            ],
            out_specs=[
                pl.BlockSpec((1, 1, C, 8, _LANE), _out_map),  # num partials
                pl.BlockSpec((1, 1, C, 8, _LANE), _out_map),  # den partials
            ],
        ),
        compiler_params=pltpu.CompilerParams(
            dimension_semantics=("parallel", "parallel", "arbitrary"),
            vmem_limit_bytes=32 * 1024 * 1024,
        ),
    )(labels4, pred4)

    # Tiny glue: fold splits + lane/sublane partials, add smooth, take the means.
    num = jnp.sum(num_p, axis=(0, 3, 4))             # (B, C)
    den = jnp.sum(den_p, axis=(0, 3, 4)) + SMOOTH    # (B, C)
    return jnp.mean(jnp.mean(num / den, axis=1))


def dice_loss_reference(y_true, y_pred):
    """Pure-JAX reference matching the PyTorch module."""
    C = y_pred.shape[1]
    yt = jax.nn.one_hot(y_true[:, 0], C, dtype=jnp.float32)    # (B, D, H, W, C)
    yt = jnp.moveaxis(yt, -1, 1)                                # (B, C, D, H, W)
    yp = jax.nn.softmax(y_pred.astype(jnp.float32), axis=1)
    axes = (2, 3, 4)
    num = jnp.sum(jnp.square(yt - yp), axis=axes)
    den = jnp.sum(jnp.square(yt), axis=axes) + jnp.sum(jnp.square(yp), axis=axes) + SMOOTH
    return jnp.mean(jnp.mean(num / den, axis=1))


if __name__ == "__main__":
    B, C, D, H, W = 2, 4, 8, 8, 8
    key = jax.random.PRNGKey(0)
    k1, k2 = jax.random.split(key)
    y_pred = jax.random.normal(k1, (B, C, D, H, W), dtype=jnp.float32)
    y_true = jax.random.randint(k2, (B, 1, D, H, W), 0, C, dtype=jnp.int32)

    out = jax.block_until_ready(dice_loss(y_true, y_pred))
    ref = jax.block_until_ready(dice_loss_reference(y_true, y_pred))
    # Tolerance loosened for the approx (EUP) reciprocal in the softmax (~1e-4 rel).
    assert jnp.allclose(out, ref, atol=2e-3, rtol=2e-3), (out, ref)
    print("KERNEL_OK")
</pallas_src>

<mosaic_0001>
module attributes {stable_mosaic.version = 11 : i64} {
  func.func @_dice_kernel(%arg0: i32, %arg1: i32, %arg2: i32, %arg3: memref<1x1x32x128xi8, #tpu.memory_space<vmem>>, %arg4: memref<1x4x32x128xf32, #tpu.memory_space<vmem>>, %arg5: memref<1x1x4x8x128xf32, #tpu.memory_space<vmem>>, %arg6: memref<1x1x4x8x128xf32, #tpu.memory_space<vmem>>) attributes {dimension_semantics = [#tpu.dimension_semantics<parallel>, #tpu.dimension_semantics<parallel>, #tpu.dimension_semantics<arbitrary>], iteration_bounds = array<i64: 1, 2, 1>, scalar_prefetch = 0 : i64, scratch_operands = 0 : i64, tpu.core_type = #tpu.core_type<tc>, window_params = [{transform_indices = @transform_0, window_bounds = array<i64: 1, 1, 32, 128>}, {transform_indices = @transform_1, window_bounds = array<i64: 1, 4, 32, 128>}, {transform_indices = @transform_2, window_bounds = array<i64: 1, 1, 4, 8, 128>}, {transform_indices = @transform_3, window_bounds = array<i64: 1, 1, 4, 8, 128>}]} {
    %c0_i32 = arith.constant 0 : i32
    %0 = arith.cmpi eq, %arg2, %c0_i32 : i32
    %1 = arith.extui %0 : i1 to i32
    %c0_i32_0 = arith.constant 0 : i32
    %2 = arith.cmpi ne, %1, %c0_i32_0 : i32
    scf.if %2 {
      %cst_107 = arith.constant 0.000000e+00 : f32
      %133 = vector.broadcast %cst_107 : f32 to vector<1x1x4x8x128xf32>
      %c0_108 = arith.constant 0 : index
      %c0_109 = arith.constant 0 : index
      %c0_110 = arith.constant 0 : index
      %c0_111 = arith.constant 0 : index
      %c0_112 = arith.constant 0 : index
      %134 = vector.load %arg5[%c0_108, %c0_109, %c0_110, %c0_111, %c0_112] : memref<1x1x4x8x128xf32, #tpu.memory_space<vmem>>, vector<1x1x4x8x128xf32>
      tpu.vector_store %arg5[%c0_108, %c0_109, %c0_110, %c0_111, %c0_112], %133 {strides = array<i32>} : memref<1x1x4x8x128xf32, #tpu.memory_space<vmem>>, vector<1x1x4x8x128xf32>,
      %cst_113 = arith.constant 0.000000e+00 : f32
      %135 = vector.broadcast %cst_113 : f32 to vector<1x1x4x8x128xf32>
      %c0_114 = arith.constant 0 : index
      %c0_115 = arith.constant 0 : index
      %c0_116 = arith.constant 0 : index
      %c0_117 = arith.constant 0 : index
      %c0_118 = arith.constant 0 : index
      %136 = vector.load %arg6[%c0_114, %c0_115, %c0_116, %c0_117, %c0_118] : memref<1x1x4x8x128xf32, #tpu.memory_space<vmem>>, vector<1x1x4x8x128xf32>
      tpu.vector_store %arg6[%c0_114, %c0_115, %c0_116, %c0_117, %c0_118], %135 {strides = array<i32>} : memref<1x1x4x8x128xf32, #tpu.memory_space<vmem>>, vector<1x1x4x8x128xf32>,
    } else {
    }
    %c0 = arith.constant 0 : index
    %c0_1 = arith.constant 0 : index
    %c0_2 = arith.constant 0 : index
    %c0_3 = arith.constant 0 : index
    %3 = vector.load %arg3[%c0, %c0_1, %c0_2, %c0_3] : memref<1x1x32x128xi8, #tpu.memory_space<vmem>>, vector<1x1x32x128xi8>
    %4 = vector.shape_cast %3 : vector<1x1x32x128xi8> to vector<32x128xi8>
    %5 = arith.extsi %4 : vector<32x128xi8> to vector<32x128xi32>
    %c0_4 = arith.constant 0 : index
    %c0_5 = arith.constant 0 : index
    %c0_6 = arith.constant 0 : index
    %c0_7 = arith.constant 0 : index
    %6 = vector.load %arg4[%c0_4, %c0_5, %c0_6, %c0_7] : memref<1x4x32x128xf32, #tpu.memory_space<vmem>>, vector<1x1x32x128xf32>
    %7 = vector.shape_cast %6 : vector<1x1x32x128xf32> to vector<32x128xf32>
    %c0_8 = arith.constant 0 : index
    %c1 = arith.constant 1 : index
    %c0_9 = arith.constant 0 : index
    %c0_10 = arith.constant 0 : index
    %8 = vector.load %arg4[%c0_8, %c1, %c0_9, %c0_10] : memref<1x4x32x128xf32, #tpu.memory_space<vmem>>, vector<1x1x32x128xf32>
    %9 = vector.shape_cast %8 : vector<1x1x32x128xf32> to vector<32x128xf32>
    %c0_11 = arith.constant 0 : index
    %c2 = arith.constant 2 : index
    %c0_12 = arith.constant 0 : index
    %c0_13 = arith.constant 0 : index
    %10 = vector.load %arg4[%c0_11, %c2, %c0_12, %c0_13] : memref<1x4x32x128xf32, #tpu.memory_space<vmem>>, vector<1x1x32x128xf32>
    %11 = vector.shape_cast %10 : vector<1x1x32x128xf32> to vector<32x128xf32>
    %c0_14 = arith.constant 0 : index
    %c3 = arith.constant 3 : index
    %c0_15 = arith.constant 0 : index
    %c0_16 = arith.constant 0 : index
    %12 = vector.load %arg4[%c0_14, %c3, %c0_15, %c0_16] : memref<1x4x32x128xf32, #tpu.memory_space<vmem>>, vector<1x1x32x128xf32>
    %13 = vector.shape_cast %12 : vector<1x1x32x128xf32> to vector<32x128xf32>
    %14 = arith.maximumf %7, %9 : vector<32x128xf32>
    %15 = arith.maximumf %14, %11 : vector<32x128xf32>
    %16 = arith.maximumf %15, %13 : vector<32x128xf32>
    %17 = arith.subf %7, %16 : vector<32x128xf32>
    %18 = math.exp %17 : vector<32x128xf32>
    %19 = arith.subf %9, %16 : vector<32x128xf32>
    %20 = math.exp %19 : vector<32x128xf32>
    %21 = arith.subf %11, %16 : vector<32x128xf32>
    %22 = math.exp %21 : vector<32x128xf32>
    %23 = arith.subf %13, %16 : vector<32x128xf32>
    %24 = math.exp %23 : vector<32x128xf32>
    %25 = arith.addf %18, %20 : vector<32x128xf32>
    %26 = arith.addf %25, %22 : vector<32x128xf32>
    %27 = arith.addf %26, %24 : vector<32x128xf32>
    %28 = tpu.reciprocal %27 {approx = true} : vector<32x128xf32> -> vector<32x128xf32>
    %c0_i32_17 = arith.constant 0 : i32
    %29 = vector.broadcast %c0_i32_17 : i32 to vector<32x128xi32>
    %30 = arith.cmpi sge, %5, %29 : vector<32x128xi32>
    %cst = arith.constant 0.000000e+00 : f32
    %31 = vector.broadcast %cst : f32 to vector<32x128xf32>
    %32 = arith.select %30, %28, %31 : vector<32x128xi1>, vector<32x128xf32>
    %33 = arith.mulf %18, %32 : vector<32x128xf32>
    %c0_i32_18 = arith.constant 0 : i32
    %34 = vector.broadcast %c0_i32_18 : i32 to vector<32x128xi32>
    %35 = arith.cmpi eq, %5, %34 : vector<32x128xi32>
    %36 = arith.extui %35 : vector<32x128xi1> to vector<32x128xi32>
    %37 = arith.sitofp %36 : vector<32x128xi32> to vector<32x128xf32>
    %38 = arith.subf %37, %33 : vector<32x128xf32>
    %39 = arith.mulf %38, %38 : vector<32x128xf32>
    %40 = arith.mulf %33, %33 : vector<32x128xf32>
    %41 = arith.addf %37, %40 : vector<32x128xf32>
    %c0_19 = arith.constant 0 : index
    %c0_20 = arith.constant 0 : index
    %c0_21 = arith.constant 0 : index
    %c0_22 = arith.constant 0 : index
    %c0_23 = arith.constant 0 : index
    %42 = vector.load %arg5[%c0_19, %c0_20, %c0_21, %c0_22, %c0_23] : memref<1x1x4x8x128xf32, #tpu.memory_space<vmem>>, vector<1x1x1x8x128xf32>
    %43 = vector.shape_cast %42 : vector<1x1x1x8x128xf32> to vector<8x128xf32>
    %44 = vector.shape_cast %39 : vector<32x128xf32> to vector<4x8x128xf32>
    %cst_24 = arith.constant dense<0.000000e+00> : vector<8x128xf32>
    %45 = vector.multi_reduction <add>, %44, %cst_24 [0] : vector<4x8x128xf32> to vector<8x128xf32>
    %46 = arith.addf %43, %45 : vector<8x128xf32>
    %c0_25 = arith.constant 0 : index
    %c0_26 = arith.constant 0 : index
    %c0_27 = arith.constant 0 : index
    %c0_28 = arith.constant 0 : index
    %c0_29 = arith.constant 0 : index
    %47 = vector.load %arg5[%c0_25, %c0_26, %c0_27, %c0_28, %c0_29] : memref<1x1x4x8x128xf32, #tpu.memory_space<vmem>>, vector<1x1x1x8x128xf32>
    %48 = vector.shape_cast %47 : vector<1x1x1x8x128xf32> to vector<8x128xf32>
    %49 = vector.shape_cast %46 : vector<8x128xf32> to vector<1x1x1x8x128xf32>
    tpu.vector_store %arg5[%c0_25, %c0_26, %c0_27, %c0_28, %c0_29], %49 {strides = array<i32>} : memref<1x1x4x8x128xf32, #tpu.memory_space<vmem>>, vector<1x1x1x8x128xf32>,
    %c0_30 = arith.constant 0 : index
    %c0_31 = arith.constant 0 : index
    %c0_32 = arith.constant 0 : index
    %c0_33 = arith.constant 0 : index
    %c0_34 = arith.constant 0 : index
    %50 = vector.load %arg6[%c0_30, %c0_31, %c0_32, %c0_33, %c0_34] : memref<1x1x4x8x128xf32, #tpu.memory_space<vmem>>, vector<1x1x1x8x128xf32>
    %51 = vector.shape_cast %50 : vector<1x1x1x8x128xf32> to vector<8x128xf32>
    %52 = vector.shape_cast %41 : vector<32x128xf32> to vector<4x8x128xf32>
    %cst_35 = arith.constant dense<0.000000e+00> : vector<8x128xf32>
    %53 = vector.multi_reduction <add>, %52, %cst_35 [0] : vector<4x8x128xf32> to vector<8x128xf32>
    %54 = arith.addf %51, %53 : vector<8x128xf32>
    %c0_36 = arith.constant 0 : index
    %c0_37 = arith.constant 0 : index
    %c0_38 = arith.constant 0 : index
    %c0_39 = arith.constant 0 : index
    %c0_40 = arith.constant 0 : index
    %55 = vector.load %arg6[%c0_36, %c0_37, %c0_38, %c0_39, %c0_40] : memref<1x1x4x8x128xf32, #tpu.memory_space<vmem>>, vector<1x1x1x8x128xf32>
    %56 = vector.shape_cast %55 : vector<1x1x1x8x128xf32> to vector<8x128xf32>
    %57 = vector.shape_cast %54 : vector<8x128xf32> to vector<1x1x1x8x128xf32>
    tpu.vector_store %arg6[%c0_36, %c0_37, %c0_38, %c0_39, %c0_40], %57 {strides = array<i32>} : memref<1x1x4x8x128xf32, #tpu.memory_space<vmem>>, vector<1x1x1x8x128xf32>,
    %58 = arith.mulf %20, %32 : vector<32x128xf32>
    %c1_i32 = arith.constant 1 : i32
    %59 = vector.broadcast %c1_i32 : i32 to vector<32x128xi32>
    %60 = arith.cmpi eq, %5, %59 : vector<32x128xi32>
    %61 = arith.extui %60 : vector<32x128xi1> to vector<32x128xi32>
    %62 = arith.sitofp %61 : vector<32x128xi32> to vector<32x128xf32>
    %63 = arith.subf %62, %58 : vector<32x128xf32>
    %64 = arith.mulf %63, %63 : vector<32x128xf32>
    %65 = arith.mulf %58, %58 : vector<32x128xf32>
    %66 = arith.addf %62, %65 : vector<32x128xf32>
    %c0_41 = arith.constant 0 : index
    %c0_42 = arith.constant 0 : index
    %c1_43 = arith.constant 1 : index
    %c0_44 = arith.constant 0 : index
    %c0_45 = arith.constant 0 : index
    %67 = vector.load %arg5[%c0_41, %c0_42, %c1_43, %c0_44, %c0_45] : memref<1x1x4x8x128xf32, #tpu.memory_space<vmem>>, vector<1x1x1x8x128xf32>
    %68 = vector.shape_cast %67 : vector<1x1x1x8x128xf32> to vector<8x128xf32>
    %69 = vector.shape_cast %64 : vector<32x128xf32> to vector<4x8x128xf32>
    %cst_46 = arith.constant dense<0.000000e+00> : vector<8x128xf32>
    %70 = vector.multi_reduction <add>, %69, %cst_46 [0] : vector<4x8x128xf32> to vector<8x128xf32>
    %71 = arith.addf %68, %70 : vector<8x128xf32>
    %c0_47 = arith.constant 0 : index
    %c0_48 = arith.constant 0 : index
    %c1_49 = arith.constant 1 : index
    %c0_50 = arith.constant 0 : index
    %c0_51 = arith.constant 0 : index
    %72 = vector.load %arg5[%c0_47, %c0_48, %c1_49, %c0_50, %c0_51] : memref<1x1x4x8x128xf32, #tpu.memory_space<vmem>>, vector<1x1x1x8x128xf32>
    %73 = vector.shape_cast %72 : vector<1x1x1x8x128xf32> to vector<8x128xf32>
    %74 = vector.shape_cast %71 : vector<8x128xf32> to vector<1x1x1x8x128xf32>
    tpu.vector_store %arg5[%c0_47, %c0_48, %c1_49, %c0_50, %c0_51], %74 {strides = array<i32>} : memref<1x1x4x8x128xf32, #tpu.memory_space<vmem>>, vector<1x1x1x8x128xf32>,
    %c0_52 = arith.constant 0 : index
    %c0_53 = arith.constant 0 : index
    %c1_54 = arith.constant 1 : index
    %c0_55 = arith.constant 0 : index
    %c0_56 = arith.constant 0 : index
    %75 = vector.load %arg6[%c0_52, %c0_53, %c1_54, %c0_55, %c0_56] : memref<1x1x4x8x128xf32, #tpu.memory_space<vmem>>, vector<1x1x1x8x128xf32>
    %76 = vector.shape_cast %75 : vector<1x1x1x8x128xf32> to vector<8x128xf32>
    %77 = vector.shape_cast %66 : vector<32x128xf32> to vector<4x8x128xf32>
    %cst_57 = arith.constant dense<0.000000e+00> : vector<8x128xf32>
    %78 = vector.multi_reduction <add>, %77, %cst_57 [0] : vector<4x8x128xf32> to vector<8x128xf32>
    %79 = arith.addf %76, %78 : vector<8x128xf32>
    %c0_58 = arith.constant 0 : index
    %c0_59 = arith.constant 0 : index
    %c1_60 = arith.constant 1 : index
    %c0_61 = arith.constant 0 : index
    %c0_62 = arith.constant 0 : index
    %80 = vector.load %arg6[%c0_58, %c0_59, %c1_60, %c0_61, %c0_62] : memref<1x1x4x8x128xf32, #tpu.memory_space<vmem>>, vector<1x1x1x8x128xf32>
    %81 = vector.shape_cast %80 : vector<1x1x1x8x128xf32> to vector<8x128xf32>
    %82 = vector.shape_cast %79 : vector<8x128xf32> to vector<1x1x1x8x128xf32>
    tpu.vector_store %arg6[%c0_58, %c0_59, %c1_60, %c0_61, %c0_62], %82 {strides = array<i32>} : memref<1x1x4x8x128xf32, #tpu.memory_space<vmem>>, vector<1x1x1x8x128xf32>,
    %83 = arith.mulf %22, %32 : vector<32x128xf32>
    %c2_i32 = arith.constant 2 : i32
    %84 = vector.broadcast %c2_i32 : i32 to vector<32x128xi32>
    %85 = arith.cmpi eq, %5, %84 : vector<32x128xi32>
    %86 = arith.extui %85 : vector<32x128xi1> to vector<32x128xi32>
    %87 = arith.sitofp %86 : vector<32x128xi32> to vector<32x128xf32>
    %88 = arith.subf %87, %83 : vector<32x128xf32>
    %89 = arith.mulf %88, %88 : vector<32x128xf32>
    %90 = arith.mulf %83, %83 : vector<32x128xf32>
    %91 = arith.addf %87, %90 : vector<32x128xf32>
    %c0_63 = arith.constant 0 : index
    %c0_64 = arith.constant 0 : index
    %c2_65 = arith.constant 2 : index
    %c0_66 = arith.constant 0 : index
    %c0_67 = arith.constant 0 : index
    %92 = vector.load %arg5[%c0_63, %c0_64, %c2_65, %c0_66, %c0_67] : memref<1x1x4x8x128xf32, #tpu.memory_space<vmem>>, vector<1x1x1x8x128xf32>
    %93 = vector.shape_cast %92 : vector<1x1x1x8x128xf32> to vector<8x128xf32>
    %94 = vector.shape_cast %89 : vector<32x128xf32> to vector<4x8x128xf32>
    %cst_68 = arith.constant dense<0.000000e+00> : vector<8x128xf32>
    %95 = vector.multi_reduction <add>, %94, %cst_68 [0] : vector<4x8x128xf32> to vector<8x128xf32>
    %96 = arith.addf %93, %95 : vector<8x128xf32>
    %c0_69 = arith.constant 0 : index
    %c0_70 = arith.constant 0 : index
    %c2_71 = arith.constant 2 : index
    %c0_72 = arith.constant 0 : index
    %c0_73 = arith.constant 0 : index
    %97 = vector.load %arg5[%c0_69, %c0_70, %c2_71, %c0_72, %c0_73] : memref<1x1x4x8x128xf32, #tpu.memory_space<vmem>>, vector<1x1x1x8x128xf32>
    %98 = vector.shape_cast %97 : vector<1x1x1x8x128xf32> to vector<8x128xf32>
    %99 = vector.shape_cast %96 : vector<8x128xf32> to vector<1x1x1x8x128xf32>
    tpu.vector_store %arg5[%c0_69, %c0_70, %c2_71, %c0_72, %c0_73], %99 {strides = array<i32>} : memref<1x1x4x8x128xf32, #tpu.memory_space<vmem>>, vector<1x1x1x8x128xf32>,
    %c0_74 = arith.constant 0 : index
    %c0_75 = arith.constant 0 : index
    %c2_76 = arith.constant 2 : index
    %c0_77 = arith.constant 0 : index
    %c0_78 = arith.constant 0 : index
    %100 = vector.load %arg6[%c0_74, %c0_75, %c2_76, %c0_77, %c0_78] : memref<1x1x4x8x128xf32, #tpu.memory_space<vmem>>, vector<1x1x1x8x128xf32>
    %101 = vector.shape_cast %100 : vector<1x1x1x8x128xf32> to vector<8x128xf32>
    %102 = vector.shape_cast %91 : vector<32x128xf32> to vector<4x8x128xf32>
    %cst_79 = arith.constant dense<0.000000e+00> : vector<8x128xf32>
    %103 = vector.multi_reduction <add>, %102, %cst_79 [0] : vector<4x8x128xf32> to vector<8x128xf32>
    %104 = arith.addf %101, %103 : vector<8x128xf32>
    %c0_80 = arith.constant 0 : index
    %c0_81 = arith.constant 0 : index
    %c2_82 = arith.constant 2 : index
    %c0_83 = arith.constant 0 : index
    %c0_84 = arith.constant 0 : index
    %105 = vector.load %arg6[%c0_80, %c0_81, %c2_82, %c0_83, %c0_84] : memref<1x1x4x8x128xf32, #tpu.memory_space<vmem>>, vector<1x1x1x8x128xf32>
    %106 = vector.shape_cast %105 : vector<1x1x1x8x128xf32> to vector<8x128xf32>
    %107 = vector.shape_cast %104 : vector<8x128xf32> to vector<1x1x1x8x128xf32>
    tpu.vector_store %arg6[%c0_80, %c0_81, %c2_82, %c0_83, %c0_84], %107 {strides = array<i32>} : memref<1x1x4x8x128xf32, #tpu.memory_space<vmem>>, vector<1x1x1x8x128xf32>,
    %108 = arith.mulf %24, %32 : vector<32x128xf32>
    %c3_i32 = arith.constant 3 : i32
    %109 = vector.broadcast %c3_i32 : i32 to vector<32x128xi32>
    %110 = arith.cmpi eq, %5, %109 : vector<32x128xi32>
    %111 = arith.extui %110 : vector<32x128xi1> to vector<32x128xi32>
    %112 = arith.sitofp %111 : vector<32x128xi32> to vector<32x128xf32>
    %113 = arith.subf %112, %108 : vector<32x128xf32>
    %114 = arith.mulf %113, %113 : vector<32x128xf32>
    %115 = arith.mulf %108, %108 : vector<32x128xf32>
    %116 = arith.addf %112, %115 : vector<32x128xf32>
    %c0_85 = arith.constant 0 : index
    %c0_86 = arith.constant 0 : index
    %c3_87 = arith.constant 3 : index
    %c0_88 = arith.constant 0 : index
    %c0_89 = arith.constant 0 : index
    %117 = vector.load %arg5[%c0_85, %c0_86, %c3_87, %c0_88, %c0_89] : memref<1x1x4x8x128xf32, #tpu.memory_space<vmem>>, vector<1x1x1x8x128xf32>
    %118 = vector.shape_cast %117 : vector<1x1x1x8x128xf32> to vector<8x128xf32>
    %119 = vector.shape_cast %114 : vector<32x128xf32> to vector<4x8x128xf32>
    %cst_90 = arith.constant dense<0.000000e+00> : vector<8x128xf32>
    %120 = vector.multi_reduction <add>, %119, %cst_90 [0] : vector<4x8x128xf32> to vector<8x128xf32>
    %121 = arith.addf %118, %120 : vector<8x128xf32>
    %c0_91 = arith.constant 0 : index
    %c0_92 = arith.constant 0 : index
    %c3_93 = arith.constant 3 : index
    %c0_94 = arith.constant 0 : index
    %c0_95 = arith.constant 0 : index
    %122 = vector.load %arg5[%c0_91, %c0_92, %c3_93, %c0_94, %c0_95] : memref<1x1x4x8x128xf32, #tpu.memory_space<vmem>>, vector<1x1x1x8x128xf32>
    %123 = vector.shape_cast %122 : vector<1x1x1x8x128xf32> to vector<8x128xf32>
    %124 = vector.shape_cast %121 : vector<8x128xf32> to vector<1x1x1x8x128xf32>
    tpu.vector_store %arg5[%c0_91, %c0_92, %c3_93, %c0_94, %c0_95], %124 {strides = array<i32>} : memref<1x1x4x8x128xf32, #tpu.memory_space<vmem>>, vector<1x1x1x8x128xf32>,
    %c0_96 = arith.constant 0 : index
    %c0_97 = arith.constant 0 : index
    %c3_98 = arith.constant 3 : index
    %c0_99 = arith.constant 0 : index
    %c0_100 = arith.constant 0 : index
    %125 = vector.load %arg6[%c0_96, %c0_97, %c3_98, %c0_99, %c0_100] : memref<1x1x4x8x128xf32, #tpu.memory_space<vmem>>, vector<1x1x1x8x128xf32>
    %126 = vector.shape_cast %125 : vector<1x1x1x8x128xf32> to vector<8x128xf32>
    %127 = vector.shape_cast %116 : vector<32x128xf32> to vector<4x8x128xf32>
    %cst_101 = arith.constant dense<0.000000e+00> : vector<8x128xf32>
    %128 = vector.multi_reduction <add>, %127, %cst_101 [0] : vector<4x8x128xf32> to vector<8x128xf32>
    %129 = arith.addf %126, %128 : vector<8x128xf32>
    %c0_102 = arith.constant 0 : index
    %c0_103 = arith.constant 0 : index
    %c3_104 = arith.constant 3 : index
    %c0_105 = arith.constant 0 : index
    %c0_106 = arith.constant 0 : index
    %130 = vector.load %arg6[%c0_102, %c0_103, %c3_104, %c0_105, %c0_106] : memref<1x1x4x8x128xf32, #tpu.memory_space<vmem>>, vector<1x1x1x8x128xf32>
    %131 = vector.shape_cast %130 : vector<1x1x1x8x128xf32> to vector<8x128xf32>
    %132 = vector.shape_cast %129 : vector<8x128xf32> to vector<1x1x1x8x128xf32>
    tpu.vector_store %arg6[%c0_102, %c0_103, %c3_104, %c0_105, %c0_106], %132 {strides = array<i32>} : memref<1x1x4x8x128xf32, #tpu.memory_space<vmem>>, vector<1x1x1x8x128xf32>,
    return
  }
  func.func @transform_0(%arg0: i32, %arg1: i32, %arg2: i32) -> (i32, i32, i32, i32) {
    %c1_i32 = arith.constant 1 : i32
    %0 = arith.muli %arg0, %c1_i32 : i32
    %1 = arith.addi %0, %arg2 : i32
    %c0_i32 = arith.constant 0 : i32
    %c0_i32_0 = arith.constant 0 : i32
    %c0_i32_1 = arith.constant 0 : i32
    return %arg1, %c0_i32, %1, %c0_i32_0 : i32, i32, i32, i32
  }
  func.func @transform_1(%arg0: i32, %arg1: i32, %arg2: i32) -> (i32, i32, i32, i32) {
    %c1_i32 = arith.constant 1 : i32
    %0 = arith.muli %arg0, %c1_i32 : i32
    %1 = arith.addi %0, %arg2 : i32
    %c0_i32 = arith.constant 0 : i32
    %c0_i32_0 = arith.constant 0 : i32
    %c0_i32_1 = arith.constant 0 : i32
    return %arg1, %c0_i32, %1, %c0_i32_0 : i32, i32, i32, i32
  }
  func.func @transform_2(%arg0: i32, %arg1: i32, %arg2: i32) -> (i32, i32, i32, i32, i32) {
    %c0_i32 = arith.constant 0 : i32
    %c0_i32_0 = arith.constant 0 : i32
    %c0_i32_1 = arith.constant 0 : i32
    %c0_i32_2 = arith.constant 0 : i32
    return %arg0, %arg1, %c0_i32, %c0_i32_0, %c0_i32_1 : i32, i32, i32, i32, i32
  }
  func.func @transform_3(%arg0: i32, %arg1: i32, %arg2: i32) -> (i32, i32, i32, i32, i32) {
    %c0_i32 = arith.constant 0 : i32
    %c0_i32_0 = arith.constant 0 : i32
    %c0_i32_1 = arith.constant 0 : i32
    %c0_i32_2 = arith.constant 0 : i32
    return %arg0, %arg1, %c0_i32, %c0_i32_0, %c0_i32_1 : i32, i32, i32, i32, i32
  }
}

</mosaic_0001>

<llo_original>
// kernel: tpu_custom_call.1
$region0: #{tpu_custom_call.1}
  #allocation0 [shape = 'u32[]', space=smem, size = 0x4, offset = 0x4, fixed_abs, tag = 'smem constant byte address 0x4 - core index']
  #allocation1 [shape = 'u32[144,128]{1,0:T(1,128)}', space=vmem, size = 0x12000, scoped, tag = 'internal scratch']
  %s0 = inlined_call_operand.hbm [shape: s8[2,1,32,128], index: 0, kind: input, shape index: {}]
  %s1 = inlined_call_operand.hbm [shape: f32[2,4,32,128], index: 1, kind: input, shape index: {}]
  %s2 = inlined_call_operand.hbm [shape: f32[1,2,4,8,128], index: 2, kind: output, shape index: {0}]
  %s3 = inlined_call_operand.hbm [shape: f32[1,2,4,8,128], index: 3, kind: output, shape index: {1}]
  %4 = xla_tuple %s2, %s3
  %s5 = sld [smem:[#allocation0]]
  $region61: #{tpu_custom_call.1} parent=0
    _
  %s7 = ssub.s32 1, %s5
  %s8 = scalar_select 0, %s7, %s5
  $region1: #{tpu_custom_call.1} parent=0
    #allocation2 [shape = 'u8[8192]{0}', space=vmem, size = 0x2000, scoped, tag = 'input window, operand 0']
    #allocation3 [shape = 's32[2]{0}', space=sflag, size = 0x8, scoped, tag = 'scoped memory for tpu_custom_call.1']
    #allocation4 [shape = 's32[2]{0}', space=sflag, size = 0x8, scoped, tag = 'scoped memory for tpu_custom_call.1']
    #allocation5 [shape = 'u8[131072]{0}', space=vmem, size = 0x20000, scoped, tag = 'input window, operand 1']
    #allocation6 [shape = 's32[2]{0}', space=sflag, size = 0x8, scoped, tag = 'scoped memory for tpu_custom_call.1']
    #allocation7 [shape = 'u8[32768]{0}', space=vmem, size = 0x8000, scoped, tag = 'output window, operand 0']
    #allocation8 [shape = 'u8[32768]{0}', space=vmem, size = 0x8000, scoped, tag = 'output window, operand 1']
    #allocation9 [shape = 's32[2]{0}', space=sflag, size = 0x8, scoped, tag = 'scoped memory for tpu_custom_call.1']
    %9 = vsyncpa [#allocation3], 0
    %s10 = scalar_lea.sflag [#allocation3], 1
    %11 = vsyncpa %s10, 0
    %12 = vsyncpa [#allocation6], 0
    %s13 = scalar_lea.sflag [#allocation6], 1
    %14 = vsyncpa %s13, 0
    %15 = vsyncpa [#allocation4], 0
    %s16 = scalar_lea.sflag [#allocation4], 1
    %17 = vsyncpa %s16, 0
    %18 = vsyncpa [#allocation9], 0
    %s19 = scalar_lea.sflag [#allocation9], 1
    %20 = vsyncpa %s19, 0
    loop: start=0, step=1, limit=4
    $region2: #{tpu_custom_call.1} parent=1 // loop_pre_header
      _
    $region3: #{tpu_custom_call.1} parent=1 // loop_header
      %s22 = sphi 0, %s26
      %p23 = scmp.ge.s32.totalorder %s22, 4
      %s29 = sphi 0, %s48
      %s30 = sphi 0, %s44
      %s31 = sphi 0, %s40
      %s32 = sphi 0, %s29
      %s33 = sphi 0, %s30
      %s34 = sphi 0, %s31
      %s35 = sphi 0, %s32
      %s36 = sphi 0, %s33
      %s37 = sphi 0, %s34
      %s55 = sphi 0, %s57
      %s58 = sphi 0, %s55
      %s59 = sphi 0, %s58
      %s75 = sphi 0, %s59
      %s85 = sphi 0, %s87
      %s88 = sphi 0, %s85
      %s89 = sphi 0, %s88
      %s105 = sphi 0, %s89
      %s113 = sphi 0, %s115
      %s116 = sphi 0, %s113
      %s117 = sphi 0, %s116
      %s133 = sphi 0, %s117
      %s141 = sphi 0, %s143
      %s144 = sphi 0, %s141
      %s145 = sphi 0, %s144
      %s161 = sphi 0, %s145
    $region4: #{tpu_custom_call.1} parent=1 // loop_header_branch
      %25 = sbr.rel (%p23) target = $region8
    $region5: #{tpu_custom_call.1} parent=1 // loop_body
      %s27 = ssub.s32 %s22, 1
      %s28 = ssub.s32 %s22, 2
      %s38 = sadd.s32 1, %s31
      %p39 = scmp.ge.s32.totalorder %s38, 1
      %s40 = scalar_select %p39, 0, %s38
      %s41 = sadd.s32 1, %s30
      %s42 = scalar_select %p39, %s41, %s30
      %p43 = scmp.ge.s32.totalorder %s42, 2
      %s44 = scalar_select %p43, 0, %s42
      %s45 = sadd.s32 1, %s29
      %s46 = scalar_select %p43, %s45, %s29
      %p47 = scmp.ge.s32.totalorder %s46, 1
      %s48 = scalar_select %p47, 0, %s46
      %s49 = sadd.s32 %s29, %s31
      %s50 = sadd.s32 %s48, %s40
      %s51 = ssub.s32 %s30, %s44
      %s52 = ssub.s32 %s49, %s50
      %s53 = sor.u32 %s51, %s52
      %p54 = scmp.eq.s32.totalorder %s53, 0
      %s56 = sadd.s32 %s55, 1
      %s57 = scalar_select %p54, %s55, %s56
      %p60 = pneg %p54
      %p61 = scmp.eq.s32.totalorder %s22, 1
      %p62 = por %p60, %p61
      %p63 = scmp.ne.s32.totalorder %s55, %s58
      %p64 = scmp.eq.s32.totalorder %s22, 0
      %p65 = por %p63, %p64
      %p66 = scmp.ne.s32.totalorder %s55, %s58
      %p67 = scmp.eq.s32.totalorder %s27, 1
      %p68 = por %p66, %p67
      %p69 = scmp.ne.s32.totalorder %s58, %s59
      %p70 = scmp.eq.s32.totalorder %s27, 0
      %p71 = por %p69, %p70
      %p72 = scmp.ne.s32.totalorder %s58, %s59
      %p73 = scmp.eq.s32.totalorder %s28, 1
      %p74 = por %p72, %p73
      %p76 = scmp.ne.s32.totalorder %s59, %s75
      %p77 = scmp.eq.s32.totalorder %s28, 0
      %p78 = por %p76, %p77
      %s79 = sadd.s32 %s29, %s31
      %s80 = sadd.s32 %s48, %s40
      %s81 = ssub.s32 %s30, %s44
      %s82 = ssub.s32 %s79, %s80
      %s83 = sor.u32 %s81, %s82
      %p84 = scmp.eq.s32.totalorder %s83, 0
      %s86 = sadd.s32 %s85, 1
      %s87 = scalar_select %p84, %s85, %s86
      %p90 = pneg %p84
      %p91 = scmp.eq.s32.totalorder %s22, 1
      %p92 = por %p90, %p91
      %p93 = scmp.ne.s32.totalorder %s85, %s88
      %p94 = scmp.eq.s32.totalorder %s22, 0
      %p95 = por %p93, %p94
      %p96 = scmp.ne.s32.totalorder %s85, %s88
      %p97 = scmp.eq.s32.totalorder %s27, 1
      %p98 = por %p96, %p97
      %p99 = scmp.ne.s32.totalorder %s88, %s89
      %p100 = scmp.eq.s32.totalorder %s27, 0
      %p101 = por %p99, %p100
      %p102 = scmp.ne.s32.totalorder %s88, %s89
      %p103 = scmp.eq.s32.totalorder %s28, 1
      %p104 = por %p102, %p103
      %p106 = scmp.ne.s32.totalorder %s89, %s105
      %p107 = scmp.eq.s32.totalorder %s28, 0
      %p108 = por %p106, %p107
      %s109 = ssub.s32 %s29, %s48
      %s110 = ssub.s32 %s30, %s44
      %s111 = sor.u32 %s109, %s110
      %p112 = scmp.eq.s32.totalorder %s111, 0
      %s114 = sadd.s32 %s113, 1
      %s115 = scalar_select %p112, %s113, %s114
      %p118 = pneg %p112
      %p119 = scmp.eq.s32.totalorder %s22, 1
      %p120 = por %p118, %p119
      %p121 = scmp.ne.s32.totalorder %s113, %s116
      %p122 = scmp.eq.s32.totalorder %s22, 0
      %p123 = por %p121, %p122
      %p124 = scmp.ne.s32.totalorder %s113, %s116
      %p125 = scmp.eq.s32.totalorder %s27, 1
      %p126 = por %p124, %p125
      %p127 = scmp.ne.s32.totalorder %s116, %s117
      %p128 = scmp.eq.s32.totalorder %s27, 0
      %p129 = por %p127, %p128
      %p130 = scmp.ne.s32.totalorder %s116, %s117
      %p131 = scmp.eq.s32.totalorder %s28, 1
      %p132 = por %p130, %p131
      %p134 = scmp.ne.s32.totalorder %s117, %s133
      %p135 = scmp.eq.s32.totalorder %s28, 0
      %p136 = por %p134, %p135
      %s137 = ssub.s32 %s29, %s48
      %s138 = ssub.s32 %s30, %s44
      %s139 = sor.u32 %s137, %s138
      %p140 = scmp.eq.s32.totalorder %s139, 0
      %s142 = sadd.s32 %s141, 1
      %s143 = scalar_select %p140, %s141, %s142
      %p146 = pneg %p140
      %p147 = scmp.eq.s32.totalorder %s22, 1
      %p148 = por %p146, %p147
      %p149 = scmp.ne.s32.totalorder %s141, %s144
      %p150 = scmp.eq.s32.totalorder %s22, 0
      %p151 = por %p149, %p150
      %p152 = scmp.ne.s32.totalorder %s141, %s144
      %p153 = scmp.eq.s32.totalorder %s27, 1
      %p154 = por %p152, %p153
      %p155 = scmp.ne.s32.totalorder %s144, %s145
      %p156 = scmp.eq.s32.totalorder %s27, 0
      %p157 = por %p155, %p156
      %p158 = scmp.ne.s32.totalorder %s144, %s145
      %p159 = scmp.eq.s32.totalorder %s28, 1
      %p160 = por %p158, %p159
      %p162 = scmp.ne.s32.totalorder %s145, %s161
      %p163 = scmp.eq.s32.totalorder %s28, 0
      %p164 = por %p162, %p163
      %p165 = scmp.le.s32.totalorder 1, %s22
      %p166 = scmp.lt.s32.totalorder %s22, 3
      %p167 = pnand %p165, %p166
      %p168 = pneg %p167
      // Predicated region
      $region9: #{tpu_custom_call.1} parent=5 // pred_check
        _
      $region10: #{tpu_custom_call.1} parent=5 // pred_check_branch
        %170 = sbr.rel (%p167) target = $region12
      $region11: #{tpu_custom_call.1} parent=5 // pred_region
        %s171 = ssub.s32 %s22, 1
      $region12: #{tpu_custom_call.1} parent=5 // pred_fallthru
        _
      %p172 = scmp.lt.s32.totalorder %s22, 2
      // Predicated region
      $region13: #{tpu_custom_call.1} parent=5 // pred_check
        %p173 = pneg %p172
      $region14: #{tpu_custom_call.1} parent=5 // pred_check_branch
        %175 = sbr.rel (%p173) target = $region16
      $region15: #{tpu_custom_call.1} parent=5 // pred_region
        // Predicated region
        $region17: #{tpu_custom_call.1} parent=15 // pred_check
          %p176 = pneg %p65
        $region18: #{tpu_custom_call.1} parent=15 // pred_check_branch
          %178 = sbr.rel (%p176) target = $region20
        $region19: #{tpu_custom_call.1} parent=15 // pred_region
          %s179 = sand.u32 %s55, 1
          %s180 = scalar_lea.sflag [#allocation3], %s179
          %s181 = sand.u32 %s55, 1
          %s182 = smul.addr %s181, 8
          %s183 = scalar_lea.vmem [#allocation2], %s182
          %s184 = sadd.s32 %s29, %s31
          %s186 = ssub.s32 128, 128
          %187 = vsyncadd %s180, %s186
          %s188 = sadd.s32 %s184, %s30
          %s189 = smul.addr %s188, 128
          %s190 = scalar_lea.hbm %s0, %s189
          %s192 = sshll.u32 %s183, 4
          %s193 = int_to_ptr.vmem [resolvable:$true] %s192
          %195 = dma.hbm_to_vmem [thread:$0]  %s190, 128, %s193, %s180
        $region20: #{tpu_custom_call.1} parent=15 // pred_fallthru
          _
        // Predicated region
        $region21: #{tpu_custom_call.1} parent=15 // pred_check
          %p196 = pneg %p95
        $region22: #{tpu_custom_call.1} parent=15 // pred_check_branch
          %198 = sbr.rel (%p196) target = $region24
        $region23: #{tpu_custom_call.1} parent=15 // pred_region
          %s199 = sand.u32 %s85, 1
          %s200 = scalar_lea.sflag [#allocation6], %s199
          %s201 = sand.u32 %s85, 1
          %s202 = smul.addr %s201, 128
          %s203 = scalar_lea.vmem [#allocation5], %s202
          %s204 = sadd.s32 %s29, %s31
          %s205 = smul.u32 4, %s204
          %s207 = ssub.s32 2048, 2048
          %208 = vsyncadd %s200, %s207
          %s209 = smul.addr %s30, 16
          %s210 = sadd.s32 %s205, %s209
          %s211 = smul.addr %s210, 128
          %s212 = scalar_lea.hbm %s1, %s211
          %s213 = sshll.u32 %s203, 4
          %s214 = int_to_ptr.vmem [resolvable:$true] %s213
          %219 = dma.hbm_to_vmem [thread:$0]  %s212, 2048, %s214, %s200, 128, 128, 8
        $region24: #{tpu_custom_call.1} parent=15 // pred_fallthru
          _
      $region16: #{tpu_custom_call.1} parent=5 // pred_fallthru
        _
      %p220 = scmp.le.s32.totalorder 1, %s22
      %p221 = scmp.lt.s32.totalorder %s22, 3
      %p222 = pnand %p220, %p221
      %p223 = pneg %p222
      // Predicated region
      $region25: #{tpu_custom_call.1} parent=5 // pred_check
        _
      $region26: #{tpu_custom_call.1} parent=5 // pred_check_branch
        %225 = sbr.rel (%p222) target = $region28
      $region27: #{tpu_custom_call.1} parent=5 // pred_region
        %s226 = ssub.s32 %s22, 1
        %s227 = sand.u32 %s58, 1
        %s228 = scalar_lea.sflag [#allocation3], %s227
        %s229 = sand.u32 %s58, 1
        %s230 = smul.addr %s229, 8
        %s231 = scalar_lea.vmem [#allocation2], %s230
        // Predicated region
        $region29: #{tpu_custom_call.1} parent=27 // pred_check
          %p232 = pneg %p71
        $region30: #{tpu_custom_call.1} parent=27 // pred_check_branch
          %234 = sbr.rel (%p232) target = $region32
        $region31: #{tpu_custom_call.1} parent=27 // pred_region
          %235 = dma.done %s228, 128
        $region32: #{tpu_custom_call.1} parent=27 // pred_fallthru
          _
        %s236 = sand.u32 %s88, 1
        %s237 = scalar_lea.sflag [#allocation6], %s236
        %s238 = sand.u32 %s88, 1
        %s239 = smul.addr %s238, 128
        %s240 = scalar_lea.vmem [#allocation5], %s239
        // Predicated region
        $region33: #{tpu_custom_call.1} parent=27 // pred_check
          %p241 = pneg %p101
        $region34: #{tpu_custom_call.1} parent=27 // pred_check_branch
          %243 = sbr.rel (%p241) target = $region36
        $region35: #{tpu_custom_call.1} parent=27 // pred_region
          %244 = dma.done %s237, 2048
        $region36: #{tpu_custom_call.1} parent=27 // pred_fallthru
          _
        %s245 = sand.u32 %s58, 1
        %s246 = scalar_lea.sflag [#allocation3], %s245
        %s247 = sand.u32 %s58, 1
        %s248 = smul.addr %s247, 8
        %s249 = scalar_lea.vmem [#allocation2], %s248
        %p250 = pneg %p71
        %p251 = pneg %p68
        %s252 = sand.u32 %s88, 1
        %s253 = scalar_lea.sflag [#allocation6], %s252
        %s254 = sand.u32 %s88, 1
        %s255 = smul.addr %s254, 128
        %s256 = scalar_lea.vmem [#allocation5], %s255
        %p257 = pneg %p101
        %p258 = pneg %p98
        %p259 = pneg %p129
        %p260 = pneg %p126
        %s261 = sand.u32 %s116, 1
        %s262 = scalar_lea.sflag [#allocation4], %s261
        %s263 = sand.u32 %s116, 1
        %s264 = smul.addr %s263, 32
        %s265 = scalar_lea.vmem [#allocation7], %s264
        %p266 = pneg %p157
        %p267 = pneg %p154
        %s268 = sand.u32 %s144, 1
        %s269 = scalar_lea.sflag [#allocation9], %s268
        %s270 = sand.u32 %s144, 1
        %s271 = smul.addr %s270, 32
        %s272 = scalar_lea.vmem [#allocation8], %s271
        %s273 = sadd.s32 %s32, %s34
        %s274 = sadd.s32 %s32, %s34
        %s275 = smul.u32 4, %s274
        %p276 = scmp.eq.s32.totalorder %s34, 0
        // Predicated region
        $region37: #{tpu_custom_call.1} parent=27 // pred_check
          %p277 = pneg %p276
        $region38: #{tpu_custom_call.1} parent=27 // pred_check_branch
          %279 = sbr.rel (%p277) target = $region40
        $region39: #{tpu_custom_call.1} parent=27 // pred_region
          %280 = vst [vmem:[%s265] sm:$0xff] 0.0
          %281 = vst [vmem:[%s265 + $0x8] sm:$0xff] 0.0
          %282 = vst [vmem:[%s265 + $0x10] sm:$0xff] 0.0
          %283 = vst [vmem:[%s265 + $0x18] sm:$0xff] 0.0
          %284 = vst [vmem:[%s272] sm:$0xff] 0.0
          %285 = vst [vmem:[%s272 + $0x8] sm:$0xff] 0.0
          %286 = vst [vmem:[%s272 + $0x10] sm:$0xff] 0.0
          %287 = vst [vmem:[%s272 + $0x18] sm:$0xff] 0.0
        $region40: #{tpu_custom_call.1} parent=27 // pred_fallthru
          _
        %v288 = vld [vmem:[%s231] sm:$0xff]
        %v289 = vunpack.c.0.s8 %v288
        %v290 = vunpack.c.1.s8 %v288
        %v291 = vunpack.c.2.s8 %v288
        %v292 = vunpack.c.3.s8 %v288
        %v293 = vld [vmem:[%s240] sm:$0xff]
        %v294 = vld [vmem:[%s240 + $0x8] sm:$0xff]
        %v295 = vld [vmem:[%s240 + $0x10] sm:$0xff]
        %v296 = vld [vmem:[%s240 + $0x18] sm:$0xff]
        %s297 = scalar_lea.vmem %s240, 32 [#allocation5]
        %v298 = vld [vmem:[%s297] sm:$0xff]
        %v299 = vld [vmem:[%s297 + $0x8] sm:$0xff]
        %v300 = vld [vmem:[%s297 + $0x10] sm:$0xff]
        %v301 = vld [vmem:[%s297 + $0x18] sm:$0xff]
        %s302 = scalar_lea.vmem %s240, 64 [#allocation5]
        %v303 = vld [vmem:[%s302] sm:$0xff]
        %v304 = vld [vmem:[%s302 + $0x8] sm:$0xff]
        %v305 = vld [vmem:[%s302 + $0x10] sm:$0xff]
        %v306 = vld [vmem:[%s302 + $0x18] sm:$0xff]
        %s307 = scalar_lea.vmem %s240, 96 [#allocation5]
        %v308 = vld [vmem:[%s307] sm:$0xff]
        %v309 = vld [vmem:[%s307 + $0x8] sm:$0xff]
        %v310 = vld [vmem:[%s307 + $0x10] sm:$0xff]
        %v311 = vld [vmem:[%s307 + $0x18] sm:$0xff]
        %v312 = vmax.f32 %v293, %v298
        %v313 = vmax.f32 %v294, %v299
        %v314 = vmax.f32 %v295, %v300
        %v315 = vmax.f32 %v296, %v301
        %v316 = vmax.f32 %v312, %v303
        %v317 = vmax.f32 %v313, %v304
        %v318 = vmax.f32 %v314, %v305
        %v319 = vmax.f32 %v315, %v306
        %v320 = vmax.f32 %v316, %v308
        %v321 = vmax.f32 %v317, %v309
        %v322 = vmax.f32 %v318, %v310
        %v323 = vmax.f32 %v319, %v311
        %v324 = vsub.f32 %v293, %v320
        %v325 = vsub.f32 %v294, %v321
        %v326 = vsub.f32 %v295, %v322
        %v327 = vsub.f32 %v296, %v323
        %v328 = vmul.f32 %v324, 1.442695
        %v329 = vpow.pop %v328
        %v330 = vmul.f32 %v325, 1.442695
        %v331 = vpow.pop %v330
        %v332 = vmul.f32 %v326, 1.442695
        %v333 = vpow.pop %v332
        %v334 = vmul.f32 %v327, 1.442695
        %v335 = vpow.pop %v334
        %v336 = vsub.f32 %v298, %v320
        %v337 = vsub.f32 %v299, %v321
        %v338 = vsub.f32 %v300, %v322
        %v339 = vsub.f32 %v301, %v323
        %v340 = vmul.f32 %v336, 1.442695
        %v341 = vpow.pop %v340
        %v342 = vmul.f32 %v337, 1.442695
        %v343 = vpow.pop %v342
        %v344 = vmul.f32 %v338, 1.442695
        %v345 = vpow.pop %v344
        %v346 = vmul.f32 %v339, 1.442695
        %v347 = vpow.pop %v346
        %v348 = vsub.f32 %v303, %v320
        %v349 = vsub.f32 %v304, %v321
        %v350 = vsub.f32 %v305, %v322
        %v351 = vsub.f32 %v306, %v323
        %v352 = vmul.f32 %v348, 1.442695
        %v353 = vpow.pop %v352
        %v354 = vmul.f32 %v349, 1.442695
        %v355 = vpow.pop %v354
        %v356 = vmul.f32 %v350, 1.442695
        %v357 = vpow.pop %v356
        %v358 = vmul.f32 %v351, 1.442695
        %v359 = vpow.pop %v358
        %v360 = vsub.f32 %v308, %v320
        %v361 = vsub.f32 %v309, %v321
        %v362 = vsub.f32 %v310, %v322
        %v363 = vsub.f32 %v311, %v323
        %v364 = vmul.f32 %v360, 1.442695
        %v365 = vpow.pop %v364
        %v366 = vmul.f32 %v361, 1.442695
        %v367 = vpow.pop %v366
        %v368 = vmul.f32 %v362, 1.442695
        %v369 = vpow.pop %v368
        %v370 = vmul.f32 %v363, 1.442695
        %v371 = vpow.pop %v370
        %v372 = vadd.f32 %v329, %v341
        %v373 = vadd.f32 %v331, %v343
        %v374 = vadd.f32 %v333, %v345
        %v375 = vadd.f32 %v335, %v347
        %v376 = vadd.f32 %v372, %v353
        %v377 = vadd.f32 %v373, %v355
        %v378 = vadd.f32 %v374, %v357
        %v379 = vadd.f32 %v375, %v359
        %v380 = vadd.f32 %v376, %v365
        %v381 = vadd.f32 %v377, %v367
        %v382 = vadd.f32 %v378, %v369
        %v383 = vadd.f32 %v379, %v371
        %v384 = vrcp.pop %v380
        %v385 = vrcp.pop %v381
        %v386 = vrcp.pop %v382
        %v387 = vrcp.pop %v383
        %vm388 = vcmp.ge.s32.totalorder %v289, 0
        %vm389 = vcmp.ge.s32.totalorder %v290, 0
        %vm390 = vcmp.ge.s32.totalorder %v291, 0
        %vm391 = vcmp.ge.s32.totalorder %v292, 0
        %v392 = vsel %vm388, %v384, 0.0
        %v393 = vsel %vm389, %v385, 0.0
        %v394 = vsel %vm390, %v386, 0.0
        %v395 = vsel %vm391, %v387, 0.0
        %v396 = vmul.f32 %v329, %v392
        %v397 = vmul.f32 %v331, %v393
        %v398 = vmul.f32 %v333, %v394
        %v399 = vmul.f32 %v335, %v395
        %vm400 = vcmp.eq.s32.totalorder %v289, 0
        %vm401 = vcmp.eq.s32.totalorder %v290, 0
        %vm402 = vcmp.eq.s32.totalorder %v291, 0
        %vm403 = vcmp.eq.s32.totalorder %v292, 0
        %v404 = vsel %vm400, 1, 0
        %v405 = vsel %vm401, 1, 0
        %v406 = vsel %vm402, 1, 0
        %v407 = vsel %vm403, 1, 0
        %v408 = vcvt.s32.f32 %v404
        %v409 = vcvt.s32.f32 %v405
        %v410 = vcvt.s32.f32 %v406
        %v411 = vcvt.s32.f32 %v407
        %v412 = vsub.f32 %v408, %v396
        %v413 = vsub.f32 %v409, %v397
        %v414 = vsub.f32 %v410, %v398
        %v415 = vsub.f32 %v411, %v399
        %v416 = vmul.f32 %v412, %v412
        %v417 = vmul.f32 %v413, %v413
        %v418 = vmul.f32 %v414, %v414
        %v419 = vmul.f32 %v415, %v415
        %v420 = vmul.f32 %v396, %v396
        %v421 = vmul.f32 %v397, %v397
        %v422 = vmul.f32 %v398, %v398
        %v423 = vmul.f32 %v399, %v399
        %v424 = vadd.f32 %v408, %v420
        %v425 = vadd.f32 %v409, %v421
        %v426 = vadd.f32 %v410, %v422
        %v427 = vadd.f32 %v411, %v423
        %v428 = vld [vmem:[%s265] sm:$0xff]
        %v429 = vadd.f32 %v416, %v417
        %v430 = vadd.f32 %v429, %v418
        %v431 = vadd.f32 %v430, %v419
        %v432 = vadd.f32 %v428, %v431
        %433 = vst [vmem:[%s265] sm:$0xff] %v432
        %v434 = vld [vmem:[%s272] sm:$0xff]
        %v435 = vadd.f32 %v424, %v425
        %v436 = vadd.f32 %v435, %v426
        %v437 = vadd.f32 %v436, %v427
        %v438 = vadd.f32 %v434, %v437
        %439 = vst [vmem:[%s272] sm:$0xff] %v438
        %v440 = vmul.f32 %v341, %v392
        %v441 = vmul.f32 %v343, %v393
        %v442 = vmul.f32 %v345, %v394
        %v443 = vmul.f32 %v347, %v395
        %vm444 = vcmp.eq.s32.totalorder %v289, 1
        %vm445 = vcmp.eq.s32.totalorder %v290, 1
        %vm446 = vcmp.eq.s32.totalorder %v291, 1
        %vm447 = vcmp.eq.s32.totalorder %v292, 1
        %v448 = vsel %vm444, 1, 0
        %v449 = vsel %vm445, 1, 0
        %v450 = vsel %vm446, 1, 0
        %v451 = vsel %vm447, 1, 0
        %v452 = vcvt.s32.f32 %v448
        %v453 = vcvt.s32.f32 %v449
        %v454 = vcvt.s32.f32 %v450
        %v455 = vcvt.s32.f32 %v451
        %v456 = vsub.f32 %v452, %v440
        %v457 = vsub.f32 %v453, %v441
        %v458 = vsub.f32 %v454, %v442
        %v459 = vsub.f32 %v455, %v443
        %v460 = vmul.f32 %v456, %v456
        %v461 = vmul.f32 %v457, %v457
        %v462 = vmul.f32 %v458, %v458
        %v463 = vmul.f32 %v459, %v459
        %v464 = vmul.f32 %v440, %v440
        %v465 = vmul.f32 %v441, %v441
        %v466 = vmul.f32 %v442, %v442
        %v467 = vmul.f32 %v443, %v443
        %v468 = vadd.f32 %v452, %v464
        %v469 = vadd.f32 %v453, %v465
        %v470 = vadd.f32 %v454, %v466
        %v471 = vadd.f32 %v455, %v467
        %s472 = scalar_lea.vmem %s265, 8 [#allocation7]
        %v473 = vld [vmem:[%s472] sm:$0xff]
        %v474 = vadd.f32 %v460, %v461
        %v475 = vadd.f32 %v474, %v462
        %v476 = vadd.f32 %v475, %v463
        %v477 = vadd.f32 %v473, %v476
        %478 = vst [vmem:[%s472] sm:$0xff] %v477
        %s479 = scalar_lea.vmem %s272, 8 [#allocation8]
        %v480 = vld [vmem:[%s479] sm:$0xff]
        %v481 = vadd.f32 %v468, %v469
        %v482 = vadd.f32 %v481, %v470
        %v483 = vadd.f32 %v482, %v471
        %v484 = vadd.f32 %v480, %v483
        %485 = vst [vmem:[%s479] sm:$0xff] %v484
        %v486 = vmul.f32 %v353, %v392
        %v487 = vmul.f32 %v355, %v393
        %v488 = vmul.f32 %v357, %v394
        %v489 = vmul.f32 %v359, %v395
        %vm490 = vcmp.eq.s32.totalorder %v289, 2
        %vm491 = vcmp.eq.s32.totalorder %v290, 2
        %vm492 = vcmp.eq.s32.totalorder %v291, 2
        %vm493 = vcmp.eq.s32.totalorder %v292, 2
        %v494 = vsel %vm490, 1, 0
        %v495 = vsel %vm491, 1, 0
        %v496 = vsel %vm492, 1, 0
        %v497 = vsel %vm493, 1, 0
        %v498 = vcvt.s32.f32 %v494
        %v499 = vcvt.s32.f32 %v495
        %v500 = vcvt.s32.f32 %v496
        %v501 = vcvt.s32.f32 %v497
        %v502 = vsub.f32 %v498, %v486
        %v503 = vsub.f32 %v499, %v487
        %v504 = vsub.f32 %v500, %v488
        %v505 = vsub.f32 %v501, %v489
        %v506 = vmul.f32 %v502, %v502
        %v507 = vmul.f32 %v503, %v503
        %v508 = vmul.f32 %v504, %v504
        %v509 = vmul.f32 %v505, %v505
        %v510 = vmul.f32 %v486, %v486
        %v511 = vmul.f32 %v487, %v487
        %v512 = vmul.f32 %v488, %v488
        %v513 = vmul.f32 %v489, %v489
        %v514 = vadd.f32 %v498, %v510
        %v515 = vadd.f32 %v499, %v511
        %v516 = vadd.f32 %v500, %v512
        %v517 = vadd.f32 %v501, %v513
        %s518 = scalar_lea.vmem %s265, 16 [#allocation7]
        %v519 = vld [vmem:[%s518] sm:$0xff]
        %v520 = vadd.f32 %v506, %v507
        %v521 = vadd.f32 %v520, %v508
        %v522 = vadd.f32 %v521, %v509
        %v523 = vadd.f32 %v519, %v522
        %524 = vst [vmem:[%s518] sm:$0xff] %v523
        %s525 = scalar_lea.vmem %s272, 16 [#allocation8]
        %v526 = vld [vmem:[%s525] sm:$0xff]
        %v527 = vadd.f32 %v514, %v515
        %v528 = vadd.f32 %v527, %v516
        %v529 = vadd.f32 %v528, %v517
        %v530 = vadd.f32 %v526, %v529
        %531 = vst [vmem:[%s525] sm:$0xff] %v530
        %v532 = vmul.f32 %v365, %v392
        %v533 = vmul.f32 %v367, %v393
        %v534 = vmul.f32 %v369, %v394
        %v535 = vmul.f32 %v371, %v395
        %vm536 = vcmp.eq.s32.totalorder %v289, 3
        %vm537 = vcmp.eq.s32.totalorder %v290, 3
        %vm538 = vcmp.eq.s32.totalorder %v291, 3
        %vm539 = vcmp.eq.s32.totalorder %v292, 3
        %v540 = vsel %vm536, 1, 0
        %v541 = vsel %vm537, 1, 0
        %v542 = vsel %vm538, 1, 0
        %v543 = vsel %vm539, 1, 0
        %v544 = vcvt.s32.f32 %v540
        %v545 = vcvt.s32.f32 %v541
        %v546 = vcvt.s32.f32 %v542
        %v547 = vcvt.s32.f32 %v543
        %v548 = vsub.f32 %v544, %v532
        %v549 = vsub.f32 %v545, %v533
        %v550 = vsub.f32 %v546, %v534
        %v551 = vsub.f32 %v547, %v535
        %v552 = vmul.f32 %v548, %v548
        %v553 = vmul.f32 %v549, %v549
        %v554 = vmul.f32 %v550, %v550
        %v555 = vmul.f32 %v551, %v551
        %v556 = vmul.f32 %v532, %v532
        %v557 = vmul.f32 %v533, %v533
        %v558 = vmul.f32 %v534, %v534
        %v559 = vmul.f32 %v535, %v535
        %v560 = vadd.f32 %v544, %v556
        %v561 = vadd.f32 %v545, %v557
        %v562 = vadd.f32 %v546, %v558
        %v563 = vadd.f32 %v547, %v559
        %s564 = scalar_lea.vmem %s265, 24 [#allocation7]
        %v565 = vld [vmem:[%s564] sm:$0xff]
        %v566 = vadd.f32 %v552, %v553
        %v567 = vadd.f32 %v566, %v554
        %v568 = vadd.f32 %v567, %v555
        %v569 = vadd.f32 %v565, %v568
        %570 = vst [vmem:[%s564] sm:$0xff] %v569
        %s571 = scalar_lea.vmem %s272, 24 [#allocation8]
        %v572 = vld [vmem:[%s571] sm:$0xff]
        %v573 = vadd.f32 %v560, %v561
        %v574 = vadd.f32 %v573, %v562
        %v575 = vadd.f32 %v574, %v563
        %v576 = vadd.f32 %v572, %v575
        %577 = vst [vmem:[%s571] sm:$0xff] %v576
        %s578 = sand.u32 %s116, 1
        %s579 = scalar_lea.sflag [#allocation4], %s578
        %s580 = sand.u32 %s116, 1
        %s581 = smul.addr %s580, 32
        %s582 = scalar_lea.vmem [#allocation7], %s581
        %s583 = sand.u32 %s144, 1
        %s584 = scalar_lea.sflag [#allocation9], %s583
        %s585 = sand.u32 %s144, 1
        %s586 = smul.addr %s585, 32
        %s587 = scalar_lea.vmem [#allocation8], %s586
        // Predicated region
        $region41: #{tpu_custom_call.1} parent=27 // pred_check
          %p588 = pneg %p126
        $region42: #{tpu_custom_call.1} parent=27 // pred_check_branch
          %590 = sbr.rel (%p588) target = $region44
        $region43: #{tpu_custom_call.1} parent=27 // pred_region
          %s592 = ssub.s32 512, 512
          %593 = vsyncadd %s579, %s592
          %s594 = smul.addr %s33, 4
          %s595 = smul.addr %s32, 8
          %s596 = sadd.s32 %s594, %s595
          %s597 = smul.addr %s596, 128
          %s598 = scalar_lea.hbm %s2, %s597
          %s599 = sshll.u32 %s582, 4
          %s600 = int_to_ptr.vmem [resolvable:$true] %s599
          %605 = dma.vmem_to_hbm [thread:$0]  %s600, 512, %s598, %s579, 128, 128, 8
        $region44: #{tpu_custom_call.1} parent=27 // pred_fallthru
          _
        // Predicated region
        $region45: #{tpu_custom_call.1} parent=27 // pred_check
          %p606 = pneg %p154
        $region46: #{tpu_custom_call.1} parent=27 // pred_check_branch
          %608 = sbr.rel (%p606) target = $region48
        $region47: #{tpu_custom_call.1} parent=27 // pred_region
          %s610 = ssub.s32 512, 512
          %611 = vsyncadd %s584, %s610
          %s612 = smul.addr %s33, 4
          %s613 = smul.addr %s32, 8
          %s614 = sadd.s32 %s612, %s613
          %s615 = smul.addr %s614, 128
          %s616 = scalar_lea.hbm %s3, %s615
          %s617 = sshll.u32 %s587, 4
          %s618 = int_to_ptr.vmem [resolvable:$true] %s617
          %623 = dma.vmem_to_hbm [thread:$0]  %s618, 512, %s616, %s584, 128, 128, 8
        $region48: #{tpu_custom_call.1} parent=27 // pred_fallthru
          _
      $region28: #{tpu_custom_call.1} parent=5 // pred_fallthru
        _
      %p624 = scmp.le.s32.totalorder 2, %s22
      // Predicated region
      $region49: #{tpu_custom_call.1} parent=5 // pred_check
        %p625 = pneg %p624
      $region50: #{tpu_custom_call.1} parent=5 // pred_check_branch
        %627 = sbr.rel (%p625) target = $region52
      $region51: #{tpu_custom_call.1} parent=5 // pred_region
        %s628 = ssub.s32 %s22, 2
        // Predicated region
        $region53: #{tpu_custom_call.1} parent=51 // pred_check
          %p629 = pneg %p132
        $region54: #{tpu_custom_call.1} parent=51 // pred_check_branch
          %631 = sbr.rel (%p629) target = $region56
        $region55: #{tpu_custom_call.1} parent=51 // pred_region
          %s632 = sand.u32 %s117, 1
          %s633 = scalar_lea.sflag [#allocation4], %s632
          %s634 = sand.u32 %s117, 1
          %s635 = smul.addr %s634, 32
          %s636 = scalar_lea.vmem [#allocation7], %s635
          %637 = dma.done %s633, 512
        $region56: #{tpu_custom_call.1} parent=51 // pred_fallthru
          _
        // Predicated region
        $region57: #{tpu_custom_call.1} parent=51 // pred_check
          %p638 = pneg %p160
        $region58: #{tpu_custom_call.1} parent=51 // pred_check_branch
          %640 = sbr.rel (%p638) target = $region60
        $region59: #{tpu_custom_call.1} parent=51 // pred_region
          %s641 = sand.u32 %s145, 1
          %s642 = scalar_lea.sflag [#allocation9], %s641
          %s643 = sand.u32 %s145, 1
          %s644 = smul.addr %s643, 32
          %s645 = scalar_lea.vmem [#allocation8], %s644
          %646 = dma.done %s642, 512
        $region60: #{tpu_custom_call.1} parent=51 // pred_fallthru
          _
      $region52: #{tpu_custom_call.1} parent=5 // pred_fallthru
        _
    $region6: #{tpu_custom_call.1} parent=1 // loop_footer
      %s26 = sadd.s32 1, %s22
    $region7: #{tpu_custom_call.1} parent=1 // loop_footer_branch
      %21 = sbr.rel target = $region3
    $region8: #{tpu_custom_call.1} parent=1 // loop_exit
      _
    %647 = vsyncpa [#allocation3], 1
    %s648 = scalar_lea.sflag [#allocation3], 1
    %649 = vsyncpa %s648, 1
    %650 = vsyncpa [#allocation6], 1
    %s651 = scalar_lea.sflag [#allocation6], 1
    %652 = vsyncpa %s651, 1
    %653 = vsyncpa [#allocation4], 1
    %s654 = scalar_lea.sflag [#allocation4], 1
    %655 = vsyncpa %s654, 1
    %656 = vsyncpa [#allocation9], 1
    %s657 = scalar_lea.sflag [#allocation9], 1
    %658 = vsyncpa %s657, 1

</llo_original>
